<compile_context>
chip_gen: v5e
topology: v5e:2x2
jax: 0.10.0
libtpu: 0.0.40
codegen_flags: <defaults>
</compile_context>

<pallas_src>
import numpy as np
import jax
import jax.numpy as jnp
from jax import lax
from jax.experimental import pallas as pl
from jax.experimental.pallas import tpu as pltpu

BN_EPS = 1e-5


def _vmem_spec():
    return pl.BlockSpec(memory_space=pltpu.MemorySpace.VMEM)


# ------------------------------ fused forward -------------------------------

def cnn2_forward(x_nchw, params):
    B, cin, H, W = x_nchw.shape
    assert cin == 1
    KS1, KS2, PAD1 = 5, 3, 1
    KK1 = KS1 * KS1
    C1 = params['conv1_w'].shape[0]            # 4
    C2 = params['conv2_w'].shape[0]            # 8
    F1 = params['fc1_w'].shape[0]              # 120
    OUTD = params['fc2_w'].shape[0]            # 10

    OH1 = H + 2 * PAD1 - KS1 + 1               # 14
    OW1 = W + 2 * PAD1 - KS1 + 1               # 14
    PH1, PW1 = OH1 // 2, OW1 // 2              # 7, 7
    OH2, OW2 = PH1 - KS2 + 1, PW1 - KS2 + 1    # 5, 5
    PH2, PW2 = OH2 // 2, OW2 // 2              # 2, 2  (floor, like torch)
    UH2, UW2 = 2 * PH2, 2 * PW2                # conv2 rows/cols the pool consumes
    FC_IN = C2 * PH2 * PW2                     # 32
    R1 = PH1 * B                               # conv1 pooled rows per pool group
    R1p = ((R1 + 7) // 8) * 8                  # pad each group to sublane multiple
    RB2 = UH2 * B                              # rows of the conv2 matmuls (8)

    # --- wrapper-side pool-grouped, lane-dense im2col for conv1 (Cin = 1).
    #     Row layout (per pool position d): ph*B + b; lane layout: pw*KK1 + k.
    x = x_nchw.reshape(B, H, W).astype(jnp.float32)
    xp = jnp.pad(x, ((0, 0), (PAD1, PAD1), (PAD1, PAD1)))
    cols = [xp[:, i:i + OH1, j:j + OW1] for i in range(KS1) for j in range(KS1)]
    pm = jnp.stack(cols, axis=-1)                         # (B, OH1, OW1, 25)
    groups = []
    for dh in range(2):
        for dw in range(2):
            g = pm[:, dh:dh + 2 * PH1:2, dw:dw + 2 * PW1:2, :]     # (B, PH1, PW1, 25)
            g = jnp.transpose(g, (1, 0, 2, 3)).reshape(R1, PW1 * KK1)
            groups.append(jnp.pad(g, ((0, R1p - R1), (0, 0))))
    patches = jnp.concatenate(groups, axis=0)             # (4*R1p, PW1*KK1)

    # --- fold BN (inference affine) into weights / downstream biases.
    #     Valid because bn*_scale = gamma/sqrt(running_var+eps) > 0, so
    #     ReLU(y*s) == ReLU(y)*s and scale/shift commute with max-pool.
    s1, t1 = params['bn1_scale'], params['bn1_shift']
    s2, t2 = params['bn2_scale'], params['bn2_shift']
    s3, t3 = params['bn3_scale'], params['bn3_shift']

    # conv1: block-diagonal over pw so the matmul emits lanes (pw, c) directly.
    w1m = (params['conv1_w'].reshape(C1, KK1) * s1[:, None]).T          # (25, C1)
    w1bd = jnp.kron(jnp.eye(PW1, dtype=jnp.float32), w1m)               # (PW1*25, PW1*C1)
    b1l = jnp.tile(params['conv1_b'] * s1, PW1).reshape(1, PW1 * C1)

    # conv2: one (PW1*C1, UW2*C2) weight per kernel row i, with the kernel
    # column offset j folded in block-diagonally (lane blocks = output ow).
    w2s = params['conv2_w'] * s2[:, None, None, None]                   # (C2, C1, 3, 3)
    w2_list = []
    for i in range(KS2):
        Wi = jnp.zeros((PW1 * C1, UW2 * C2), jnp.float32)
        for j in range(KS2):
            S = np.zeros((PW1, UW2), np.float32)
            for ow in range(UW2):
                S[ow + j, ow] = 1.0
            Wi = Wi + jnp.kron(jnp.asarray(S), w2s[:, :, i, j].T)
        w2_list.append(Wi)
    w2stk = jnp.stack(w2_list, axis=0)                                  # (KS2, PW1*C1, UW2*C2)
    corr2 = jnp.einsum('c,ocij->o', t1, w2s)                            # bn1 shift folded
    b2l = jnp.tile(params['conv2_b'] * s2 + corr2, UW2).reshape(1, UW2 * C2)

    # fc1: permute rows to (qh, qw, c) (our flatten order), fold bn3 scale and
    # bn2 shift; fc2: fold bn3 shift.
    wf1 = params['fc1_w'].reshape(F1, C2, PH2, PW2)
    wf1 = jnp.transpose(wf1, (2, 3, 1, 0)).reshape(FC_IN, F1) * s3[None, :]
    bf1 = (params['fc1_b'] * s3 + jnp.tile(t2, PH2 * PW2) @ wf1).reshape(1, F1)
    wf2 = params['fc2_w'].T                                             # (F1, OUTD)
    bf2 = (params['fc2_b'] + t3 @ wf2).reshape(1, OUTD)

    def kernel(p_ref, w1_ref, b1_ref, w2_ref, b2_ref,
               wf1_ref, bf1_ref, wf2_ref, bf2_ref, out_ref):
        # ---- conv1 (+bias+ReLU, BN scale pre-folded): one block-diag matmul
        #      covering all 4 pool positions; 2x2 pool = 3 elementwise maxima
        #      over 8-aligned row groups.  Result stays in vregs, lane-dense:
        #      h1[ph*B + b, pw*C1 + c].
        y1 = jnp.dot(p_ref[...], w1_ref[...], preferred_element_type=jnp.float32)
        y1 = jnp.maximum(y1 + b1_ref[...], 0.0)                 # (4*R1p, PW1*C1)
        h1 = jnp.maximum(jnp.maximum(y1[0 * R1p:1 * R1p], y1[1 * R1p:2 * R1p]),
                         jnp.maximum(y1[2 * R1p:3 * R1p], y1[3 * R1p:4 * R1p]))

        # ---- conv2: 3 accumulating matmuls, one contiguous row slab per
        #      kernel row i (no per-element im2col).  Output is lane-dense:
        #      y2[oh*B + b, ow*C2 + c].
        y2 = jnp.dot(h1[0:RB2, :], w2_ref[0], preferred_element_type=jnp.float32)
        for i in range(1, KS2):
            y2 = y2 + jnp.dot(h1[i * B:i * B + RB2, :], w2_ref[i],
                              preferred_element_type=jnp.float32)
        y2 = jnp.maximum(y2 + b2_ref[...], 0.0)                 # (UH2*B, UW2*C2)

        # ---- 2x2 max-pool of conv2 + flatten: whole-slab maxima + lane concat.
        #      xfc lanes ordered (qh, qw, c); torch's NCHW flatten is folded
        #      into wf1's row permutation.
        mw = [jnp.maximum(y2[:, (2 * qw) * C2:(2 * qw + 1) * C2],
                          y2[:, (2 * qw + 1) * C2:(2 * qw + 2) * C2])
              for qw in range(PW2)]
        m = mw[0] if PW2 == 1 else jnp.concatenate(mw, axis=1)  # (UH2*B, PW2*C2)
        qs = [jnp.maximum(m[(2 * qh) * B:(2 * qh + 1) * B, :],
                          m[(2 * qh + 1) * B:(2 * qh + 2) * B, :])
              for qh in range(PH2)]
        xfc = qs[0] if PH2 == 1 else jnp.concatenate(qs, axis=1)  # (B, FC_IN)

        # ---- fc1 + ReLU (BN3 scale folded) -> fc2 (only HBM store).
        h = jnp.maximum(jnp.dot(xfc, wf1_ref[...],
                                preferred_element_type=jnp.float32) + bf1_ref[...], 0.0)
        out_ref[...] = (jnp.dot(h, wf2_ref[...], preferred_element_type=jnp.float32)
                        + bf2_ref[...])

    return pl.pallas_call(
        kernel,
        out_shape=jax.ShapeDtypeStruct((B, OUTD), jnp.float32),
        in_specs=[_vmem_spec()] * 9,
        out_specs=_vmem_spec(),
    )(patches, w1bd, b1l, w2stk, b2l, wf1, bf1, wf2, bf2)


# ------------------------- deterministic parameters -------------------------

def conv_output_size(w, kernel_size=1, stride=1, padding=0):
    return (w - kernel_size + 2 * padding) / stride + 1


def _xavier_uniform(key, shape, fan_in, fan_out):
    bound = float(np.sqrt(6.0 / (fan_in + fan_out)))
    return jax.random.uniform(key, shape, jnp.float32, -bound, bound)


def init_params(key, shape=(16, 16)):
    ks1, ks2, pad1 = 5, 3, 1
    _x = conv_output_size(shape[0], kernel_size=ks1, padding=pad1); _x = int(_x / 2)
    _x = conv_output_size(_x, kernel_size=ks2);                     _x = int(_x / 2)
    _y = conv_output_size(shape[1], kernel_size=ks1, padding=pad1); _y = int(_y / 2)
    _y = conv_output_size(_y, kernel_size=ks2);                     _y = int(_y / 2)
    fc1_in = 8 * _x * _y

    k1, k2, k3, k4 = jax.random.split(key, 4)
    bn_scale = 1.0 / np.sqrt(1.0 + BN_EPS)   # gamma / sqrt(running_var + eps)
    return {
        'conv1_w': _xavier_uniform(k1, (4, 1, ks1, ks1), 1 * ks1 * ks1, 4 * ks1 * ks1),
        'conv1_b': jnp.zeros((4,), jnp.float32),
        'bn1_scale': jnp.full((4,), bn_scale, jnp.float32),
        'bn1_shift': jnp.zeros((4,), jnp.float32),
        'conv2_w': _xavier_uniform(k2, (8, 4, ks2, ks2), 4 * ks2 * ks2, 8 * ks2 * ks2),
        'conv2_b': jnp.zeros((8,), jnp.float32),
        'bn2_scale': jnp.full((8,), bn_scale, jnp.float32),
        'bn2_shift': jnp.zeros((8,), jnp.float32),
        'fc1_w': _xavier_uniform(k3, (120, fc1_in), fc1_in, 120),
        'fc1_b': jnp.zeros((120,), jnp.float32),
        'bn3_scale': jnp.full((120,), bn_scale, jnp.float32),
        'bn3_shift': jnp.zeros((120,), jnp.float32),
        'fc2_w': _xavier_uniform(k4, (10, 120), 120, 10),
        'fc2_b': jnp.zeros((10,), jnp.float32),
    }


# ------------------------------- pure-JAX ref --------------------------------

def reference_forward(x_nchw, params):
    def bn(y, scale, shift):
        return y * scale[None, :, None, None] + shift[None, :, None, None]

    def maxpool(y):
        return lax.reduce_window(y, -jnp.inf, lax.max,
                                 (1, 1, 2, 2), (1, 1, 2, 2), 'VALID')

    y = lax.conv_general_dilated(x_nchw, params['conv1_w'], (1, 1),
                                 ((1, 1), (1, 1)),
                                 dimension_numbers=('NCHW', 'OIHW', 'NCHW'))
    y = y + params['conv1_b'][None, :, None, None]
    y = maxpool(bn(jnp.maximum(y, 0.0), params['bn1_scale'], params['bn1_shift']))
    y = lax.conv_general_dilated(y, params['conv2_w'], (1, 1),
                                 ((0, 0), (0, 0)),
                                 dimension_numbers=('NCHW', 'OIHW', 'NCHW'))
    y = y + params['conv2_b'][None, :, None, None]
    y = maxpool(bn(jnp.maximum(y, 0.0), params['bn2_scale'], params['bn2_shift']))
    y = y.reshape(y.shape[0], -1)
    h = jnp.maximum(y @ params['fc1_w'].T + params['fc1_b'], 0.0)
    h = h * params['bn3_scale'] + params['bn3_shift']
    return h @ params['fc2_w'].T + params['fc2_b']


# ---------------------------------- main -------------------------------------

if __name__ == "__main__":
    key = jax.random.PRNGKey(0)
    pkey, xkey, bkey = jax.random.split(key, 3)
    spatial = (16, 16)                       # CNN2(shape=(16, 16)) -> fc1 in = 32
    params = init_params(pkey, spatial)
    x = jax.random.normal(xkey, (2, 1, spatial[0], spatial[1]), jnp.float32)

    fwd = jax.jit(cnn2_forward)

    # 1) deterministic torch-style init (bn shift = 0, scale = 1/sqrt(1+eps))
    out = jax.block_until_ready(fwd(x, params))
    ref = reference_forward(x, params)
    np.testing.assert_allclose(np.asarray(out), np.asarray(ref),
                               rtol=1e-4, atol=1e-4)
    assert out.shape == (2, 10)

    # 2) exercise the BN-folding correction terms with nonzero shifts and
    #    non-unit (positive) scales.
    k1, k2, k3, k4, k5, k6 = jax.random.split(bkey, 6)
    params2 = dict(params)
    params2['bn1_scale'] = jax.random.uniform(k1, (4,), jnp.float32, 0.5, 1.5)
    params2['bn1_shift'] = 0.1 * jax.random.normal(k2, (4,), jnp.float32)
    params2['bn2_scale'] = jax.random.uniform(k3, (8,), jnp.float32, 0.5, 1.5)
    params2['bn2_shift'] = 0.1 * jax.random.normal(k4, (8,), jnp.float32)
    params2['bn3_scale'] = jax.random.uniform(k5, (120,), jnp.float32, 0.5, 1.5)
    params2['bn3_shift'] = 0.1 * jax.random.normal(k6, (120,), jnp.float32)
    out2 = jax.block_until_ready(fwd(x, params2))
    ref2 = reference_forward(x, params2)
    np.testing.assert_allclose(np.asarray(out2), np.asarray(ref2),
                               rtol=1e-3, atol=1e-3)

    print("KERNEL_OK")
</pallas_src>

<mosaic_0001>
module attributes {stable_mosaic.version = 11 : i64} {
  func.func @kernel(%arg0: memref<64x175xf32, #tpu.memory_space<vmem>>, %arg1: memref<175x28xf32, #tpu.memory_space<vmem>>, %arg2: memref<1x28xf32, #tpu.memory_space<vmem>>, %arg3: memref<3x28x32xf32, #tpu.memory_space<vmem>>, %arg4: memref<1x32xf32, #tpu.memory_space<vmem>>, %arg5: memref<32x120xf32, #tpu.memory_space<vmem>>, %arg6: memref<1x120xf32, #tpu.memory_space<vmem>>, %arg7: memref<120x10xf32, #tpu.memory_space<vmem>>, %arg8: memref<1x10xf32, #tpu.memory_space<vmem>>, %arg9: memref<2x10xf32, #tpu.memory_space<vmem>>) attributes {dimension_semantics = [], scalar_prefetch = 0 : i64, scratch_operands = 0 : i64, tpu.core_type = #tpu.core_type<tc>} {
    %c0 = arith.constant 0 : index
    %c0_0 = arith.constant 0 : index
    %0 = vector.load %arg0[%c0, %c0_0] : memref<64x175xf32, #tpu.memory_space<vmem>>, vector<64x175xf32>
    %c0_1 = arith.constant 0 : index
    %c0_2 = arith.constant 0 : index
    %1 = vector.load %arg1[%c0_1, %c0_2] : memref<175x28xf32, #tpu.memory_space<vmem>>, vector<175x28xf32>
    %cst = arith.constant dense<0.000000e+00> : vector<64x28xf32>
    %2 = tpu.matmul %0, %1, %cst {dimension_numbers = #tpu.dot_dimension_numbers<[1], [0], [0], [1], [0, 0, 1, 1], [], []>} : vector<64x175xf32>, vector<175x28xf32>, vector<64x28xf32> -> vector<64x28xf32>
    %c0_3 = arith.constant 0 : index
    %c0_4 = arith.constant 0 : index
    %3 = vector.load %arg2[%c0_3, %c0_4] : memref<1x28xf32, #tpu.memory_space<vmem>>, vector<1x28xf32>
    %4 = vector.broadcast %3 : vector<1x28xf32> to vector<64x28xf32>
    %5 = arith.addf %2, %4 : vector<64x28xf32>
    %cst_5 = arith.constant 0.000000e+00 : f32
    %6 = vector.broadcast %cst_5 : f32 to vector<64x28xf32>
    %7 = arith.maximumf %5, %6 : vector<64x28xf32>
    %8 = vector.extract_strided_slice %7 {offsets = [0, 0], sizes = [16, 28], strides = [1, 1]} : vector<64x28xf32> to vector<16x28xf32>
    %9 = vector.extract_strided_slice %7 {offsets = [16, 0], sizes = [16, 28], strides = [1, 1]} : vector<64x28xf32> to vector<16x28xf32>
    %10 = arith.maximumf %8, %9 : vector<16x28xf32>
    %11 = vector.extract_strided_slice %7 {offsets = [32, 0], sizes = [16, 28], strides = [1, 1]} : vector<64x28xf32> to vector<16x28xf32>
    %12 = vector.extract_strided_slice %7 {offsets = [48, 0], sizes = [16, 28], strides = [1, 1]} : vector<64x28xf32> to vector<16x28xf32>
    %13 = arith.maximumf %11, %12 : vector<16x28xf32>
    %14 = arith.maximumf %10, %13 : vector<16x28xf32>
    %15 = vector.extract_strided_slice %14 {offsets = [0, 0], sizes = [8, 28], strides = [1, 1]} : vector<16x28xf32> to vector<8x28xf32>
    %c0_6 = arith.constant 0 : index
    %c0_7 = arith.constant 0 : index
    %c0_8 = arith.constant 0 : index
    %16 = vector.load %arg3[%c0_6, %c0_7, %c0_8] : memref<3x28x32xf32, #tpu.memory_space<vmem>>, vector<1x28x32xf32>
    %17 = vector.shape_cast %16 : vector<1x28x32xf32> to vector<28x32xf32>
    %cst_9 = arith.constant dense<0.000000e+00> : vector<8x32xf32>
    %18 = tpu.matmul %15, %17, %cst_9 {dimension_numbers = #tpu.dot_dimension_numbers<[1], [0], [0], [1], [0, 0, 1, 1], [], []>} : vector<8x28xf32>, vector<28x32xf32>, vector<8x32xf32> -> vector<8x32xf32>
    %19 = vector.extract_strided_slice %14 {offsets = [2, 0], sizes = [8, 28], strides = [1, 1]} : vector<16x28xf32> to vector<8x28xf32>
    %c1 = arith.constant 1 : index
    %c0_10 = arith.constant 0 : index
    %c0_11 = arith.constant 0 : index
    %20 = vector.load %arg3[%c1, %c0_10, %c0_11] : memref<3x28x32xf32, #tpu.memory_space<vmem>>, vector<1x28x32xf32>
    %21 = vector.shape_cast %20 : vector<1x28x32xf32> to vector<28x32xf32>
    %cst_12 = arith.constant dense<0.000000e+00> : vector<8x32xf32>
    %22 = tpu.matmul %19, %21, %cst_12 {dimension_numbers = #tpu.dot_dimension_numbers<[1], [0], [0], [1], [0, 0, 1, 1], [], []>} : vector<8x28xf32>, vector<28x32xf32>, vector<8x32xf32> -> vector<8x32xf32>
    %23 = arith.addf %18, %22 : vector<8x32xf32>
    %24 = vector.extract_strided_slice %14 {offsets = [4, 0], sizes = [8, 28], strides = [1, 1]} : vector<16x28xf32> to vector<8x28xf32>
    %c2 = arith.constant 2 : index
    %c0_13 = arith.constant 0 : index
    %c0_14 = arith.constant 0 : index
    %25 = vector.load %arg3[%c2, %c0_13, %c0_14] : memref<3x28x32xf32, #tpu.memory_space<vmem>>, vector<1x28x32xf32>
    %26 = vector.shape_cast %25 : vector<1x28x32xf32> to vector<28x32xf32>
    %cst_15 = arith.constant dense<0.000000e+00> : vector<8x32xf32>
    %27 = tpu.matmul %24, %26, %cst_15 {dimension_numbers = #tpu.dot_dimension_numbers<[1], [0], [0], [1], [0, 0, 1, 1], [], []>} : vector<8x28xf32>, vector<28x32xf32>, vector<8x32xf32> -> vector<8x32xf32>
    %28 = arith.addf %23, %27 : vector<8x32xf32>
    %c0_16 = arith.constant 0 : index
    %c0_17 = arith.constant 0 : index
    %29 = vector.load %arg4[%c0_16, %c0_17] : memref<1x32xf32, #tpu.memory_space<vmem>>, vector<1x32xf32>
    %30 = vector.broadcast %29 : vector<1x32xf32> to vector<8x32xf32>
    %31 = arith.addf %28, %30 : vector<8x32xf32>
    %cst_18 = arith.constant 0.000000e+00 : f32
    %32 = vector.broadcast %cst_18 : f32 to vector<8x32xf32>
    %33 = arith.maximumf %31, %32 : vector<8x32xf32>
    %34 = vector.extract_strided_slice %33 {offsets = [0, 0], sizes = [8, 8], strides = [1, 1]} : vector<8x32xf32> to vector<8x8xf32>
    %35 = vector.extract_strided_slice %33 {offsets = [0, 8], sizes = [8, 8], strides = [1, 1]} : vector<8x32xf32> to vector<8x8xf32>
    %36 = arith.maximumf %34, %35 : vector<8x8xf32>
    %37 = vector.extract_strided_slice %33 {offsets = [0, 16], sizes = [8, 8], strides = [1, 1]} : vector<8x32xf32> to vector<8x8xf32>
    %38 = vector.extract_strided_slice %33 {offsets = [0, 24], sizes = [8, 8], strides = [1, 1]} : vector<8x32xf32> to vector<8x8xf32>
    %39 = arith.maximumf %37, %38 : vector<8x8xf32>
    %40 = tpu.concatenate %36, %39 in 1 : vector<8x8xf32>, vector<8x8xf32> -> vector<8x16xf32>
    %41 = vector.extract_strided_slice %40 {offsets = [0, 0], sizes = [2, 16], strides = [1, 1]} : vector<8x16xf32> to vector<2x16xf32>
    %42 = vector.extract_strided_slice %40 {offsets = [2, 0], sizes = [2, 16], strides = [1, 1]} : vector<8x16xf32> to vector<2x16xf32>
    %43 = arith.maximumf %41, %42 : vector<2x16xf32>
    %44 = vector.extract_strided_slice %40 {offsets = [4, 0], sizes = [2, 16], strides = [1, 1]} : vector<8x16xf32> to vector<2x16xf32>
    %45 = vector.extract_strided_slice %40 {offsets = [6, 0], sizes = [2, 16], strides = [1, 1]} : vector<8x16xf32> to vector<2x16xf32>
    %46 = arith.maximumf %44, %45 : vector<2x16xf32>
    %47 = tpu.concatenate %43, %46 in 1 : vector<2x16xf32>, vector<2x16xf32> -> vector<2x32xf32>
    %c0_19 = arith.constant 0 : index
    %c0_20 = arith.constant 0 : index
    %48 = vector.load %arg5[%c0_19, %c0_20] : memref<32x120xf32, #tpu.memory_space<vmem>>, vector<32x120xf32>
    %cst_21 = arith.constant dense<0.000000e+00> : vector<2x120xf32>
    %49 = tpu.matmul %47, %48, %cst_21 {dimension_numbers = #tpu.dot_dimension_numbers<[1], [0], [0], [1], [0, 0, 1, 1], [], []>} : vector<2x32xf32>, vector<32x120xf32>, vector<2x120xf32> -> vector<2x120xf32>
    %c0_22 = arith.constant 0 : index
    %c0_23 = arith.constant 0 : index
    %50 = vector.load %arg6[%c0_22, %c0_23] : memref<1x120xf32, #tpu.memory_space<vmem>>, vector<1x120xf32>
    %51 = vector.broadcast %50 : vector<1x120xf32> to vector<2x120xf32>
    %52 = arith.addf %49, %51 : vector<2x120xf32>
    %cst_24 = arith.constant 0.000000e+00 : f32
    %53 = vector.broadcast %cst_24 : f32 to vector<2x120xf32>
    %54 = arith.maximumf %52, %53 : vector<2x120xf32>
    %c0_25 = arith.constant 0 : index
    %c0_26 = arith.constant 0 : index
    %55 = vector.load %arg7[%c0_25, %c0_26] : memref<120x10xf32, #tpu.memory_space<vmem>>, vector<120x10xf32>
    %cst_27 = arith.constant dense<0.000000e+00> : vector<2x10xf32>
    %56 = tpu.matmul %54, %55, %cst_27 {dimension_numbers = #tpu.dot_dimension_numbers<[1], [0], [0], [1], [0, 0, 1, 1], [], []>} : vector<2x120xf32>, vector<120x10xf32>, vector<2x10xf32> -> vector<2x10xf32>
    %c0_28 = arith.constant 0 : index
    %c0_29 = arith.constant 0 : index
    %57 = vector.load %arg8[%c0_28, %c0_29] : memref<1x10xf32, #tpu.memory_space<vmem>>, vector<1x10xf32>
    %58 = vector.broadcast %57 : vector<1x10xf32> to vector<2x10xf32>
    %59 = arith.addf %56, %58 : vector<2x10xf32>
    %c0_30 = arith.constant 0 : index
    %c0_31 = arith.constant 0 : index
    %60 = vector.load %arg9[%c0_30, %c0_31] : memref<2x10xf32, #tpu.memory_space<vmem>>, vector<2x10xf32>
    tpu.vector_store %arg9[%c0_30, %c0_31], %59 {strides = array<i32>} : memref<2x10xf32, #tpu.memory_space<vmem>>, vector<2x10xf32>,
    return
  }
}

</mosaic_0001>

<llo_original>
// kernel: tile.28
$region0: #{tile.28}
  #allocation0 [shape = 's32[1]{0}', space=sflag, size = 0x4, scoped, tag = 'scoped memory for tile.28']
  %s0 = inlined_call_operand.vmem [shape: f32[8], index: 0, kind: input, shape index: {}]
  %s1 = inlined_call_operand.vmem [shape: f32[4,8], index: 1, kind: output, shape index: {}]
  // Predicated region
  $region2: #{tile.28} parent=0 // pred_check
    _
  $region3: #{tile.28} parent=0 // pred_check_branch
    %3 = sbr.rel (0) target = $region5
  $region4: #{tile.28} parent=0 // pred_region
    _
  $region5: #{tile.28} parent=0 // pred_fallthru
    _
  %v4 = vld [vmem:[%s0] ss:$0 sm:$0xff]
  %5 = vst [vmem:[%s1] sm:$0xf] %v4

// kernel: tile.29
$region0: #{tile.29}
  %s0 = inlined_call_operand.vmem [shape: f32[4,8], index: 0, kind: input, shape index: {}]
  %s1 = inlined_call_operand.vmem [shape: f32[32], index: 1, kind: output, shape index: {}]
  $region1: #{tile.29} parent=0
    #allocation0 [shape = 'u8[4096]{0}', space=vmem, size = 0x1000, scoped, tag = 'scoped mem for output reshape']
    #allocation1 [shape = 'u8[4096]{0}', space=vmem, size = 0x1000, scoped, tag = 'scoped mem for input reshape']
    %s3 = ssub.s32 16, 1
    %v4 = vld [vmem:[%s0] sm:%s3]
    %5 = vst [vmem:[#allocation1] sm:%s3] %v4
    %v6 = vld [vmem:[#allocation1] sm:$0x1]
    %vm7 = vcmask 64512
    %8 = vst.msk [vmem:[#allocation0] sm:$0x1] %vm7, %v6
    %s9 = scalar_lea.vmem [#allocation1], 3
    %v10 = vld [vmem:[%s9] sm:$0x1]
    %11 = vrot.lane.b32.xlu0 %v10, 24
    %v12 = vpop.permute.xlu0 %11
    %vm13 = vcmask 261312
    %14 = vst.msk [vmem:[#allocation0] sm:$0x1] %vm13, %v12
    %s15 = scalar_lea.vmem [#allocation1], 2
    %v16 = vld [vmem:[%s15] sm:$0x1]
    %17 = vrot.lane.b32.xlu0 %v16, 16
    %v18 = vpop.permute.xlu0 %17
    %vm19 = vcmask 195712
    %20 = vst.msk [vmem:[#allocation0] sm:$0x1] %vm19, %v18
    %s21 = scalar_lea.vmem [#allocation1], 1
    %v22 = vld [vmem:[%s21] sm:$0x1]
    %23 = vrot.lane.b32.xlu0 %v22, 8
    %v24 = vpop.permute.xlu0 %23
    %vm25 = vcmask 130112
    %26 = vst.msk [vmem:[#allocation0] sm:$0x1] %vm25, %v24
    %s28 = ssub.s32 2, 1
    %v29 = vld [vmem:[#allocation0] sm:%s28]
    %s31 = ssub.s32 2, 1
    %32 = vst [vmem:[%s1] sm:%s31] %v29

// kernel: tile.24
$region0: #{tile.24}
  %s0 = inlined_call_operand.vmem [shape: f32[4,8], index: 0, kind: input, shape index: {}]
  %s1 = inlined_call_operand.vmem [shape: f32[1,32], index: 1, kind: output, shape index: {}]
  $region1: #{tile.24} parent=0
    #allocation0 [shape = 'u8[4096]{0}', space=vmem, size = 0x1000, scoped, tag = 'scoped mem for output reshape']
    #allocation1 [shape = 'u8[4096]{0}', space=vmem, size = 0x1000, scoped, tag = 'scoped mem for input reshape']
    %s3 = ssub.s32 16, 1
    %v4 = vld [vmem:[%s0] sm:%s3]
    %5 = vst [vmem:[#allocation1] sm:%s3] %v4
    %v6 = vld [vmem:[#allocation1] sm:$0x1]
    %vm7 = vcmask 64512
    %8 = vst.msk [vmem:[#allocation0] sm:$0x1] %vm7, %v6
    %s9 = scalar_lea.vmem [#allocation1], 3
    %v10 = vld [vmem:[%s9] sm:$0x1]
    %11 = vrot.lane.b32.xlu0 %v10, 24
    %v12 = vpop.permute.xlu0 %11
    %vm13 = vcmask 261312
    %14 = vst.msk [vmem:[#allocation0] sm:$0x1] %vm13, %v12
    %s15 = scalar_lea.vmem [#allocation1], 2
    %v16 = vld [vmem:[%s15] sm:$0x1]
    %17 = vrot.lane.b32.xlu0 %v16, 16
    %v18 = vpop.permute.xlu0 %17
    %vm19 = vcmask 195712
    %20 = vst.msk [vmem:[#allocation0] sm:$0x1] %vm19, %v18
    %s21 = scalar_lea.vmem [#allocation1], 1
    %v22 = vld [vmem:[%s21] sm:$0x1]
    %23 = vrot.lane.b32.xlu0 %v22, 8
    %v24 = vpop.permute.xlu0 %23
    %vm25 = vcmask 130112
    %26 = vst.msk [vmem:[#allocation0] sm:$0x1] %vm25, %v24
    %s28 = ssub.s32 2, 1
    %v29 = vld [vmem:[#allocation0] sm:%s28]
    %s31 = ssub.s32 2, 1
    %32 = vst [vmem:[%s1] sm:%s31] %v29

// kernel: mul.47
$region0: #{mul.47}
  #allocation0 [shape = 's32[1]{0}', space=sflag, size = 0x4, scoped, tag = 'scoped memory for mul.47']
  %s0 = inlined_call_operand.vmem [shape: f32[4], index: 0, kind: input, shape index: {}]
  %s1 = inlined_call_operand.vmem [shape: f32[4], index: 1, kind: input, shape index: {}]
  %s2 = inlined_call_operand.vmem [shape: f32[4], index: 2, kind: output, shape index: {}]
  %v3 = vld [vmem:[%s0] sm:$0x1]
  %v4 = vld [vmem:[%s1] sm:$0x1]
  %5 = xla_tuple %v3, %v4
  %6 = xla_tuple %5
  %v7 = vmul.f32 %v3, %v4
  %8 = xla_tuple %v7
  %9 = vst [vmem:[%s2] sm:$0x1] %v7

// kernel: tile.18
$region0: #{tile.18}
  #allocation0 [shape = 's32[1]{0}', space=sflag, size = 0x4, scoped, tag = 'scoped memory for tile.18']
  %s0 = inlined_call_operand.vmem [shape: f32[4], index: 0, kind: input, shape index: {}]
  %s1 = inlined_call_operand.vmem [shape: f32[7,4], index: 1, kind: output, shape index: {}]
  // Predicated region
  $region2: #{tile.18} parent=0 // pred_check
    _
  $region3: #{tile.18} parent=0 // pred_check_branch
    %3 = sbr.rel (0) target = $region5
  $region4: #{tile.18} parent=0 // pred_region
    _
  $region5: #{tile.18} parent=0 // pred_fallthru
    _
  %v4 = vld [vmem:[%s0] ss:$0 sm:$0xff]
  %5 = vst [vmem:[%s1] sm:$0xff] %v4

// kernel: tile.19
$region0: #{tile.19}
  %s0 = inlined_call_operand.vmem [shape: f32[7,4], index: 0, kind: input, shape index: {}]
  %s1 = inlined_call_operand.vmem [shape: f32[1,28], index: 1, kind: output, shape index: {}]
  $region1: #{tile.19} parent=0
    #allocation0 [shape = 'u8[4096]{0}', space=vmem, size = 0x1000, scoped, tag = 'scoped mem for output reshape']
    %v2 = vld [vmem:[%s0] sm:$0x1]
    %vm3 = vcmask 31744
    %4 = vst.msk [vmem:[#allocation0] sm:$0x1] %vm3, %v2
    %s5 = scalar_lea.vmem %s0, 6
    %v6 = vld [vmem:[%s5] sm:$0x1]
    %7 = vrot.lane.b32.xlu0 %v6, 24
    %v8 = vpop.permute.xlu0 %7
    %vm9 = vcmask 228544
    %10 = vst.msk [vmem:[#allocation0] sm:$0x1] %vm9, %v8
    %s11 = scalar_lea.vmem %s0, 5
    %v12 = vld [vmem:[%s11] sm:$0x1]
    %13 = vrot.lane.b32.xlu0 %v12, 20
    %v14 = vpop.permute.xlu0 %13
    %vm15 = vcmask 195744
    %16 = vst.msk [vmem:[#allocation0] sm:$0x1] %vm15, %v14
    %s17 = scalar_lea.vmem %s0, 4
    %v18 = vld [vmem:[%s17] sm:$0x1]
    %19 = vrot.lane.b32.xlu0 %v18, 16
    %v20 = vpop.permute.xlu0 %19
    %vm21 = vcmask 162944
    %22 = vst.msk [vmem:[#allocation0] sm:$0x1] %vm21, %v20
    %s23 = scalar_lea.vmem %s0, 3
    %v24 = vld [vmem:[%s23] sm:$0x1]
    %25 = vrot.lane.b32.xlu0 %v24, 12
    %v26 = vpop.permute.xlu0 %25
    %vm27 = vcmask 130144
    %28 = vst.msk [vmem:[#allocation0] sm:$0x1] %vm27, %v26
    %s29 = scalar_lea.vmem %s0, 2
    %v30 = vld [vmem:[%s29] sm:$0x1]
    %31 = vrot.lane.b32.xlu0 %v30, 8
    %v32 = vpop.permute.xlu0 %31
    %vm33 = vcmask 97344
    %34 = vst.msk [vmem:[#allocation0] sm:$0x1] %vm33, %v32
    %s35 = scalar_lea.vmem %s0, 1
    %v36 = vld [vmem:[%s35] sm:$0x1]
    %37 = vrot.lane.b32.xlu0 %v36, 4
    %v38 = vpop.permute.xlu0 %37
    %vm39 = vcmask 64544
    %40 = vst.msk [vmem:[#allocation0] sm:$0x1] %vm39, %v38
    %s42 = ssub.s32 2, 1
    %v43 = vld [vmem:[#allocation0] sm:%s42]
    %s45 = ssub.s32 2, 1
    %46 = vst [vmem:[%s1] sm:%s45] %v43

// kernel: cnn2_forward.1
$region0: #{cnn2_forward.1}
  #allocation0 [shape = 'u32[]', space=smem, size = 0x4, offset = 0x4, fixed_abs, tag = 'smem constant byte address 0x4 - core index']
  #allocation1 [shape = 'u32[72,128]{1,0:T(1,128)}', space=vmem, size = 0x9000, scoped, tag = 'internal scratch']
  %s0 = inlined_call_operand.vmem [shape: f32[64,175], index: 0, kind: input, shape index: {}]
  %s1 = inlined_call_operand.vmem [shape: f32[175,28], index: 1, kind: input, shape index: {}]
  %s2 = inlined_call_operand.vmem [shape: f32[1,28], index: 2, kind: input, shape index: {}]
  %s3 = inlined_call_operand.vmem [shape: f32[3,28,32], index: 3, kind: input, shape index: {}]
  %s4 = inlined_call_operand.vmem [shape: f32[1,32], index: 4, kind: input, shape index: {}]
  %s5 = inlined_call_operand.vmem [shape: f32[32,120], index: 5, kind: input, shape index: {}]
  %s6 = inlined_call_operand.vmem [shape: f32[1,120], index: 6, kind: input, shape index: {}]
  %s7 = inlined_call_operand.vmem [shape: f32[120,10], index: 7, kind: input, shape index: {}]
  %s8 = inlined_call_operand.vmem [shape: f32[1,10], index: 8, kind: input, shape index: {}]
  %s9 = inlined_call_operand.hbm [shape: f32[2,10], index: 9, kind: output, shape index: {}]
  %s10 = sld [smem:[#allocation0]]
  $region46: #{cnn2_forward.1} parent=0
    _
  %s12 = ssub.s32 1, %s10
  %s13 = scalar_select 0, %s12, %s10
  $region1: #{cnn2_forward.1} parent=0
    #allocation2 [shape = 'u8[1024]{0}', space=vmem, size = 0x400, scoped, tag = 'output window, operand 0, single buffered']
    #allocation3 [shape = 's32[1]{0}', space=sflag, size = 0x4, scoped, tag = 'scoped memory for cnn2_forward.1']
    %14 = vsyncpa [#allocation3], 0
    // Predicated region
    $region2: #{cnn2_forward.1} parent=1 // pred_check
      _
    $region3: #{cnn2_forward.1} parent=1 // pred_check_branch
      %16 = sbr.rel (0) target = $region5
    $region4: #{cnn2_forward.1} parent=1 // pred_region
      _
    $region5: #{cnn2_forward.1} parent=1 // pred_fallthru
      _
    // Predicated region
    $region6: #{cnn2_forward.1} parent=1 // pred_check
      _
    $region7: #{cnn2_forward.1} parent=1 // pred_check_branch
      %18 = sbr.rel (0) target = $region9
    $region8: #{cnn2_forward.1} parent=1 // pred_region
      _
    $region9: #{cnn2_forward.1} parent=1 // pred_fallthru
      _
    // Predicated region
    $region10: #{cnn2_forward.1} parent=1 // pred_check
      _
    $region11: #{cnn2_forward.1} parent=1 // pred_check_branch
      %20 = sbr.rel (0) target = $region13
    $region12: #{cnn2_forward.1} parent=1 // pred_region
      _
    $region13: #{cnn2_forward.1} parent=1 // pred_fallthru
      _
    // Predicated region
    $region14: #{cnn2_forward.1} parent=1 // pred_check
      _
    $region15: #{cnn2_forward.1} parent=1 // pred_check_branch
      %22 = sbr.rel (0) target = $region17
    $region16: #{cnn2_forward.1} parent=1 // pred_region
      _
    $region17: #{cnn2_forward.1} parent=1 // pred_fallthru
      _
    // Predicated region
    $region18: #{cnn2_forward.1} parent=1 // pred_check
      _
    $region19: #{cnn2_forward.1} parent=1 // pred_check_branch
      %24 = sbr.rel (0) target = $region21
    $region20: #{cnn2_forward.1} parent=1 // pred_region
      _
    $region21: #{cnn2_forward.1} parent=1 // pred_fallthru
      _
    // Predicated region
    $region22: #{cnn2_forward.1} parent=1 // pred_check
      _
    $region23: #{cnn2_forward.1} parent=1 // pred_check_branch
      %26 = sbr.rel (0) target = $region25
    $region24: #{cnn2_forward.1} parent=1 // pred_region
      _
    $region25: #{cnn2_forward.1} parent=1 // pred_fallthru
      _
    // Predicated region
    $region26: #{cnn2_forward.1} parent=1 // pred_check
      _
    $region27: #{cnn2_forward.1} parent=1 // pred_check_branch
      %28 = sbr.rel (0) target = $region29
    $region28: #{cnn2_forward.1} parent=1 // pred_region
      _
    $region29: #{cnn2_forward.1} parent=1 // pred_fallthru
      _
    // Predicated region
    $region30: #{cnn2_forward.1} parent=1 // pred_check
      _
    $region31: #{cnn2_forward.1} parent=1 // pred_check_branch
      %30 = sbr.rel (0) target = $region33
    $region32: #{cnn2_forward.1} parent=1 // pred_region
      _
    $region33: #{cnn2_forward.1} parent=1 // pred_fallthru
      _
    // Predicated region
    $region34: #{cnn2_forward.1} parent=1 // pred_check
      _
    $region35: #{cnn2_forward.1} parent=1 // pred_check_branch
      %32 = sbr.rel (0) target = $region37
    $region36: #{cnn2_forward.1} parent=1 // pred_region
      _
    $region37: #{cnn2_forward.1} parent=1 // pred_fallthru
      _
    %v33 = vld [vmem:[%s0] sm:$0xff]
    %v34 = vld [vmem:[%s0 + $0x8] sm:$0xff]
    %v35 = vld [vmem:[%s0 + $0x10] sm:$0xff]
    %v36 = vld [vmem:[%s0 + $0x18] sm:$0xff]
    %v37 = vld [vmem:[%s0 + $0x20] sm:$0xff]
    %v38 = vld [vmem:[%s0 + $0x28] sm:$0xff]
    %v39 = vld [vmem:[%s0 + $0x30] sm:$0xff]
    %v40 = vld [vmem:[%s0 + $0x38] sm:$0xff]
    %v41 = vld [vmem:[%s0 + $0x40] sm:$0xff]
    %v42 = vld [vmem:[%s0 + $0x48] sm:$0xff]
    %v43 = vld [vmem:[%s0 + $0x50] sm:$0xff]
    %v44 = vld [vmem:[%s0 + $0x58] sm:$0xff]
    %v45 = vld [vmem:[%s0 + $0x60] sm:$0xff]
    %v46 = vld [vmem:[%s0 + $0x68] sm:$0xff]
    %v47 = vld [vmem:[%s0 + $0x70] sm:$0xff]
    %v48 = vld [vmem:[%s0 + $0x78] sm:$0xff]
    %v49 = vld [vmem:[%s1] sm:$0xff]
    %v50 = vld [vmem:[%s1 + $0x8] sm:$0xff]
    %v51 = vld [vmem:[%s1 + $0x10] sm:$0xff]
    %v52 = vld [vmem:[%s1 + $0x18] sm:$0xff]
    %v53 = vld [vmem:[%s1 + $0x20] sm:$0xff]
    %v54 = vld [vmem:[%s1 + $0x28] sm:$0xff]
    %v55 = vld [vmem:[%s1 + $0x30] sm:$0xff]
    %v56 = vld [vmem:[%s1 + $0x38] sm:$0xff]
    %v57 = vld [vmem:[%s1 + $0x40] sm:$0xff]
    %v58 = vld [vmem:[%s1 + $0x48] sm:$0xff]
    %v59 = vld [vmem:[%s1 + $0x50] sm:$0xff]
    %v60 = vld [vmem:[%s1 + $0x58] sm:$0xff]
    %v61 = vld [vmem:[%s1 + $0x60] sm:$0xff]
    %v62 = vld [vmem:[%s1 + $0x68] sm:$0xff]
    %v63 = vld [vmem:[%s1 + $0x70] sm:$0xff]
    %v64 = vld [vmem:[%s1 + $0x78] sm:$0xff]
    %v65 = vld [vmem:[%s1 + $0x80] sm:$0xff]
    %v66 = vld [vmem:[%s1 + $0x88] sm:$0xff]
    %v67 = vld [vmem:[%s1 + $0x90] sm:$0xff]
    %v68 = vld [vmem:[%s1 + $0x98] sm:$0xff]
    %v69 = vld [vmem:[%s1 + $0xa0] sm:$0xff]
    %v70 = vld [vmem:[%s1 + $0xa8] sm:$0x7f]
    %v71 = vld [vmem:[%s2] sm:$0x1]
    %v73 = vperm.slane %v71, 0
    %vm75 = vcmask 384000
    %v77 = vsel %vm75, %v34, 0
    %v80 = vsel %vm75, %v36, 0
    %v83 = vsel %vm75, %v38, 0
    %v86 = vsel %vm75, %v40, 0
    %v89 = vsel %vm75, %v42, 0
    %v92 = vsel %vm75, %v44, 0
    %v95 = vsel %vm75, %v46, 0
    %v98 = vsel %vm75, %v48, 0
    %vm100 = vcmask 1046528
    %v102 = vsel %vm100, %v70, 0
    %104 = vmatpush.msra.mxu0 %v64
    %105 = vmatpush.msra.mxu0 %v63
    %106 = vmatpush.msra.mxu0 %v62
    %107 = vmatpush.msra.mxu0 %v61
    %108 = vmatpush.msra.mxu0 %v60
    %109 = vmatpush.msra.mxu0 %v59
    %110 = vmatpush.msra.mxu0 %v58
    %111 = vmatpush.msra.mxu0 %v57
    %112 = vmatpush.msra.mxu0 %v56
    %113 = vmatpush.msra.mxu0 %v55
    %114 = vmatpush.msra.mxu0 %v54
    %115 = vmatpush.msra.mxu0 %v53
    %116 = vmatpush.msra.mxu0 %v52
    %117 = vmatpush.msra.mxu0 %v51
    %118 = vmatpush.msra.mxu0 %v50
    %119 = vmatpush.msra.mxu0 %v49
    %120 = vmatmul.f32.gmra.mxu0 %v33
    %v121 = vpop.f32.mrf.mxu0
    %v122 = vadd.f32 %v73, %v121
    %123 = vmatmul.f32.gmra.mxu0 %v35
    %v124 = vpop.f32.mrf.mxu0
    %v125 = vadd.f32 %v73, %v124
    %126 = vmatmul.f32.gmra.mxu0 %v37
    %v127 = vpop.f32.mrf.mxu0
    %v128 = vadd.f32 %v73, %v127
    %129 = vmatmul.f32.gmra.mxu0 %v39
    %v130 = vpop.f32.mrf.mxu0
    %v131 = vadd.f32 %v73, %v130
    %132 = vmatmul.f32.gmra.mxu0 %v41
    %v133 = vpop.f32.mrf.mxu0
    %v134 = vadd.f32 %v73, %v133
    %135 = vmatmul.f32.gmra.mxu0 %v43
    %v136 = vpop.f32.mrf.mxu0
    %v137 = vadd.f32 %v73, %v136
    %138 = vmatmul.f32.gmra.mxu0 %v45
    %v139 = vpop.f32.mrf.mxu0
    %v140 = vadd.f32 %v73, %v139
    %141 = vmatmul.f32.gmra.mxu0 %v47
    %v142 = vpop.f32.mrf.mxu0
    %v143 = vadd.f32 %v73, %v142
    %144 = vdwg.mxu0
    %145 = vmatpush.msra.mxu0 0.0
    %146 = vmatpush.msra.mxu0 0.0
    %147 = vmatpush.msra.mxu0 0.0
    %148 = vmatpush.msra.mxu0 0.0
    %149 = vmatpush.msra.mxu0 0.0
    %150 = vmatpush.msra.mxu0 0.0
    %151 = vmatpush.msra.mxu0 0.0
    %152 = vmatpush.msra.mxu0 0.0
    %153 = vmatpush.msra.mxu0 0.0
    %154 = vmatpush.msra.mxu0 0.0
    %155 = vmatpush.msra.mxu0 %v102
    %156 = vmatpush.msra.mxu0 %v69
    %157 = vmatpush.msra.mxu0 %v68
    %158 = vmatpush.msra.mxu0 %v67
    %159 = vmatpush.msra.mxu0 %v66
    %160 = vmatpush.msra.mxu0 %v65
    %161 = vmatmul.f32.gmra.mxu0 %v77
    %v162 = vpop.f32.mrf.mxu0
    %v163 = vadd.f32 %v122, %v162
    %164 = vmatmul.f32.gmra.mxu0 %v80
    %v165 = vpop.f32.mrf.mxu0
    %v166 = vadd.f32 %v125, %v165
    %167 = vmatmul.f32.gmra.mxu0 %v83
    %v168 = vpop.f32.mrf.mxu0
    %v169 = vadd.f32 %v128, %v168
    %170 = vmatmul.f32.gmra.mxu0 %v86
    %v171 = vpop.f32.mrf.mxu0
    %v172 = vadd.f32 %v131, %v171
    %173 = vmatmul.f32.gmra.mxu0 %v89
    %v174 = vpop.f32.mrf.mxu0
    %v175 = vadd.f32 %v134, %v174
    %176 = vmatmul.f32.gmra.mxu0 %v92
    %v177 = vpop.f32.mrf.mxu0
    %v178 = vadd.f32 %v137, %v177
    %179 = vmatmul.f32.gmra.mxu0 %v95
    %v180 = vpop.f32.mrf.mxu0
    %v181 = vadd.f32 %v140, %v180
    %182 = vmatmul.f32.gmra.mxu0 %v98
    %v183 = vpop.f32.mrf.mxu0
    %v184 = vadd.f32 %v143, %v183
    %185 = vdwg.mxu0
    %v186 = vmax.f32 %v163, 0.0
    %v187 = vmax.f32 %v166, 0.0
    %v188 = vmax.f32 %v169, 0.0
    %v189 = vmax.f32 %v172, 0.0
    %v190 = vmax.f32 %v175, 0.0
    %v191 = vmax.f32 %v178, 0.0
    %v192 = vmax.f32 %v181, 0.0
    %v193 = vmax.f32 %v184, 0.0
    %v194 = vmax.f32 %v186, %v188
    %v195 = vmax.f32 %v187, %v189
    %v196 = vmax.f32 %v190, %v192
    %v197 = vmax.f32 %v191, %v193
    %v198 = vmax.f32 %v194, %v196
    %v199 = vmax.f32 %v195, %v197
    %v200 = vld [vmem:[%s3] sm:$0xff]
    %v201 = vld [vmem:[%s3 + $0x8] sm:$0xff]
    %v202 = vld [vmem:[%s3 + $0x10] sm:$0xff]
    %v203 = vld [vmem:[%s3 + $0x18] sm:$0xf]
    %s204 = scalar_lea.vmem %s3, 32
    %v205 = vld [vmem:[%s204] sm:$0xff]
    %v206 = vld [vmem:[%s204 + $0x8] sm:$0xff]
    %v207 = vld [vmem:[%s204 + $0x10] sm:$0xff]
    %v208 = vld [vmem:[%s204 + $0x18] sm:$0xf]
    %vm211 = vcmask 1045504
    %v212 = vrot.slane %v198, 2
    %v213 = vrot.slane %v199, 2
    %v214 = vsel %vm211, %v212, %v213
    %vm215 = vcmask 228352
    %v216 = vsel %vm215, %v214, 0
    %vm218 = vcmask 1043456
    %v220 = vsel %vm218, %v208, 0
    %222 = vmatpush.msra.mxu0 0.0
    %223 = vmatpush.msra.mxu0 0.0
    %224 = vmatpush.msra.mxu0 0.0
    %225 = vmatpush.msra.mxu0 0.0
    %226 = vmatpush.msra.mxu0 0.0
    %227 = vmatpush.msra.mxu0 0.0
    %228 = vmatpush.msra.mxu0 0.0
    %229 = vmatpush.msra.mxu0 0.0
    %230 = vmatpush.msra.mxu0 0.0
    %231 = vmatpush.msra.mxu0 0.0
    %232 = vmatpush.msra.mxu0 0.0
    %233 = vmatpush.msra.mxu0 0.0
    %234 = vmatpush.msra.mxu0 %v220
    %235 = vmatpush.msra.mxu0 %v207
    %236 = vmatpush.msra.mxu0 %v206
    %237 = vmatpush.msra.mxu0 %v205
    %238 = vmatmul.f32.gmra.mxu0 %v216
    %v239 = vpop.f32.mrf.mxu0
    %v240 = vadd.f32 0.0, %v239
    %241 = vdwg.mxu0
    %v242 = vsel %vm215, %v198, 0
    %v245 = vsel %vm218, %v203, 0
    %247 = vmatpush.msra.mxu0 0.0
    %248 = vmatpush.msra.mxu0 0.0
    %249 = vmatpush.msra.mxu0 0.0
    %250 = vmatpush.msra.mxu0 0.0
    %251 = vmatpush.msra.mxu0 0.0
    %252 = vmatpush.msra.mxu0 0.0
    %253 = vmatpush.msra.mxu0 0.0
    %254 = vmatpush.msra.mxu0 0.0
    %255 = vmatpush.msra.mxu0 0.0
    %256 = vmatpush.msra.mxu0 0.0
    %257 = vmatpush.msra.mxu0 0.0
    %258 = vmatpush.msra.mxu0 0.0
    %259 = vmatpush.msra.mxu0 %v245
    %260 = vmatpush.msra.mxu0 %v202
    %261 = vmatpush.msra.mxu0 %v201
    %262 = vmatpush.msra.mxu0 %v200
    %263 = vmatmul.f32.gmra.mxu0 %v242
    %v264 = vpop.f32.mrf.mxu0
    %v265 = vadd.f32 %v240, %v264
    %266 = vdwg.mxu0
    %s267 = scalar_lea.vmem %s3, 64
    %v268 = vld [vmem:[%s267] sm:$0xff]
    %v269 = vld [vmem:[%s267 + $0x8] sm:$0xff]
    %v270 = vld [vmem:[%s267 + $0x10] sm:$0xff]
    %v271 = vld [vmem:[%s267 + $0x18] sm:$0xf]
    %v272 = vrot.slane %v198, 4
    %v273 = vrot.slane %v199, 4
    %v274 = vsel %vm218, %v272, %v273
    %v275 = vsel %vm215, %v274, 0
    %v278 = vsel %vm218, %v271, 0
    %280 = vmatpush.msra.mxu0 0.0
    %281 = vmatpush.msra.mxu0 0.0
    %282 = vmatpush.msra.mxu0 0.0
    %283 = vmatpush.msra.mxu0 0.0
    %284 = vmatpush.msra.mxu0 0.0
    %285 = vmatpush.msra.mxu0 0.0
    %286 = vmatpush.msra.mxu0 0.0
    %287 = vmatpush.msra.mxu0 0.0
    %288 = vmatpush.msra.mxu0 0.0
    %289 = vmatpush.msra.mxu0 0.0
    %290 = vmatpush.msra.mxu0 0.0
    %291 = vmatpush.msra.mxu0 0.0
    %292 = vmatpush.msra.mxu0 %v278
    %293 = vmatpush.msra.mxu0 %v270
    %294 = vmatpush.msra.mxu0 %v269
    %295 = vmatpush.msra.mxu0 %v268
    %296 = vmatmul.f32.gmra.mxu0 %v275
    %v297 = vpop.f32.mrf.mxu0
    %v298 = vadd.f32 0.0, %v297
    %299 = vdwg.mxu0
    %v300 = vadd.f32 %v265, %v298
    %v301 = vld [vmem:[%s4] sm:$0x1]
    %v303 = vperm.slane %v301, 0
    %v305 = vadd.f32 %v300, %v303
    %v306 = vmax.f32 %v305, 0.0
    %308 = vrot.lane.b32.xlu0 %v306, 120
    %v309 = vpop.permute.xlu0 %308
    %v311 = vmax.f32 %v306, %v309
    %313 = vrot.lane.b32.xlu0 %v311, 120
    %v314 = vpop.permute.xlu0 %313
    %vm316 = vcmask 64512
    %v317 = vsel %vm316, %v311, %v314
    %v319 = vrot.slane %v317, 2
    %v321 = vmax.f32 %v317, %v319
    %v323 = vrot.slane %v321, 4
    %324 = vrot.lane.b32.xlu0 %v323, 16
    %v325 = vpop.permute.xlu0 %324
    %vm327 = vcmask 130048
    %v328 = vsel %vm327, %v321, %v325
    %v329 = vld [vmem:[%s5] sm:$0xff]
    %v330 = vld [vmem:[%s5 + $0x8] sm:$0xff]
    %v331 = vld [vmem:[%s5 + $0x10] sm:$0xff]
    %v332 = vld [vmem:[%s5 + $0x18] sm:$0xff]
    %v333 = vld [vmem:[%s6] sm:$0x1]
    %v335 = vperm.slane %v333, 0
    %vm337 = vcmask 261120
    %v339 = vsel %vm337, %v328, 0
    %341 = vmatpush.msra.mxu0 0.0
    %342 = vmatpush.msra.mxu0 0.0
    %343 = vmatpush.msra.mxu0 0.0
    %344 = vmatpush.msra.mxu0 0.0
    %345 = vmatpush.msra.mxu0 0.0
    %346 = vmatpush.msra.mxu0 0.0
    %347 = vmatpush.msra.mxu0 0.0
    %348 = vmatpush.msra.mxu0 0.0
    %349 = vmatpush.msra.mxu0 0.0
    %350 = vmatpush.msra.mxu0 0.0
    %351 = vmatpush.msra.mxu0 0.0
    %352 = vmatpush.msra.mxu0 0.0
    %353 = vmatpush.msra.mxu0 %v332
    %354 = vmatpush.msra.mxu0 %v331
    %355 = vmatpush.msra.mxu0 %v330
    %356 = vmatpush.msra.mxu0 %v329
    %357 = vmatmul.f32.gmra.mxu0 %v339
    %v358 = vpop.f32.mrf.mxu0
    %v359 = vadd.f32 %v335, %v358
    %360 = vdwg.mxu0
    %v361 = vmax.f32 %v359, 0.0
    %v362 = vld [vmem:[%s7] sm:$0xff]
    %v363 = vld [vmem:[%s7 + $0x8] sm:$0xff]
    %v364 = vld [vmem:[%s7 + $0x10] sm:$0xff]
    %v365 = vld [vmem:[%s7 + $0x18] sm:$0xff]
    %v366 = vld [vmem:[%s7 + $0x20] sm:$0xff]
    %v367 = vld [vmem:[%s7 + $0x28] sm:$0xff]
    %v368 = vld [vmem:[%s7 + $0x30] sm:$0xff]
    %v369 = vld [vmem:[%s7 + $0x38] sm:$0xff]
    %v370 = vld [vmem:[%s7 + $0x40] sm:$0xff]
    %v371 = vld [vmem:[%s7 + $0x48] sm:$0xff]
    %v372 = vld [vmem:[%s7 + $0x50] sm:$0xff]
    %v373 = vld [vmem:[%s7 + $0x58] sm:$0xff]
    %v374 = vld [vmem:[%s7 + $0x60] sm:$0xff]
    %v375 = vld [vmem:[%s7 + $0x68] sm:$0xff]
    %v376 = vld [vmem:[%s7 + $0x70] sm:$0xff]
    %v377 = vld [vmem:[%s8] sm:$0x1]
    %v379 = vperm.slane %v377, 0
    %vm381 = vcmask 982016
    %v383 = vsel %vm381, %v361, 0
    %385 = vmatpush.msra.mxu0 0.0
    %386 = vmatpush.msra.mxu0 %v376
    %387 = vmatpush.msra.mxu0 %v375
    %388 = vmatpush.msra.mxu0 %v374
    %389 = vmatpush.msra.mxu0 %v373
    %390 = vmatpush.msra.mxu0 %v372
    %391 = vmatpush.msra.mxu0 %v371
    %392 = vmatpush.msra.mxu0 %v370
    %393 = vmatpush.msra.mxu0 %v369
    %394 = vmatpush.msra.mxu0 %v368
    %395 = vmatpush.msra.mxu0 %v367
    %396 = vmatpush.msra.mxu0 %v366
    %397 = vmatpush.msra.mxu0 %v365
    %398 = vmatpush.msra.mxu0 %v364
    %399 = vmatpush.msra.mxu0 %v363
    %400 = vmatpush.msra.mxu0 %v362
    %401 = vmatmul.f32.gmra.mxu0 %v383
    %v402 = vpop.f32.mrf.mxu0
    %v403 = vadd.f32 %v379, %v402
    %404 = vdwg.mxu0
    %vm405 = vcmask 74752
    %406 = vst.msk [vmem:[#allocation2] sm:$0x3] %vm405, %v403
    // Predicated region
    $region38: #{cnn2_forward.1} parent=1 // pred_check
      _
    $region39: #{cnn2_forward.1} parent=1 // pred_check_branch
      %408 = sbr.rel (0) target = $region41
    $region40: #{cnn2_forward.1} parent=1 // pred_region
      %410 = vsyncadd [#allocation3], 0
      %s412 = sshll.u32 [#allocation2], 4
      %s413 = int_to_ptr.vmem [resolvable:$true] %s412
      %s414 = sshll.u32 %s9, 4
      %s415 = int_to_ptr.hbm [resolvable:$true] %s414
      %417 = dma.vmem_to_hbm [thread:$0]  %s413, 32, %s415, [#allocation3]
    $region41: #{cnn2_forward.1} parent=1 // pred_fallthru
      _
    // Predicated region
    $region42: #{cnn2_forward.1} parent=1 // pred_check
      _
    $region43: #{cnn2_forward.1} parent=1 // pred_check_branch
      %419 = sbr.rel (0) target = $region45
    $region44: #{cnn2_forward.1} parent=1 // pred_region
      %421 = dma.done [#allocation3], 32
    $region45: #{cnn2_forward.1} parent=1 // pred_fallthru
      _
    %422 = vsyncpa [#allocation3], 1

</llo_original>
